<compile_context>
chip_gen: v7x
topology: tpu7x:2x2x1
jax: 0.10.0
libtpu: 0.0.40
codegen_flags: <defaults>
</compile_context>

<pallas_src>
import jax
import jax.numpy as jnp
from jax.experimental import pallas as pl
from jax.experimental.pallas import tpu as pltpu

_MIB = 1024 * 1024


def _vmem_capacity_bytes():
    """Physical VMEM of the local chip; conservative v7x fallback (64 MiB)."""
    try:
        return int(pltpu.get_tpu_info().vmem_capacity_bytes)
    except Exception:
        return 64 * _MIB


# --------------------- kernel A: batch-invariant base slab -------------------

def _base_slab_kernel(patches_ref, w_ref, b_ref, pos_ref, slab_ref):
    """slab[:G]  = pos[:G]
       slab[G:]  = patches @ W + bias + pos[G:]      (runs exactly once)

    patches_ref : (P, K)   unfolded image_init patches
    w_ref       : (K, H)   flattened conv weight
    b_ref       : (1, H)   conv bias
    pos_ref     : (T, H)   full position embeddings
    slab_ref    : (T, H)
    """
    T, _ = slab_ref.shape
    P = patches_ref.shape[0]
    G = T - P
    pe = jnp.dot(patches_ref[...], w_ref[...], preferred_element_type=jnp.float32)
    slab_ref[:G, :] = pos_ref[:G, :].astype(slab_ref.dtype)
    slab_ref[G:, :] = (pe + b_ref[...].astype(jnp.float32)
                       + pos_ref[G:, :].astype(jnp.float32)).astype(slab_ref.dtype)


def compute_base_slab(patches, w_flat, bias, pos_tokens, out_dtype):
    """One-shot call; everything lives in VMEM for the duration."""
    T, H = pos_tokens.shape
    in_bytes = sum(int(a.size) * jnp.dtype(a.dtype).itemsize
                   for a in (patches, w_flat, bias, pos_tokens))
    out_bytes = T * H * jnp.dtype(out_dtype).itemsize
    cap = _vmem_capacity_bytes()
    vmem_limit = int(min(cap - 4 * _MIB, max(32 * _MIB, 2 * (in_bytes + out_bytes))))
    # TODO(synk): for very large images (patches/W exceeding VMEM even with a
    # raised limit) tile this matmul over P/K with a grid instead of one shot.
    return pl.pallas_call(
        _base_slab_kernel,
        out_shape=jax.ShapeDtypeStruct((T, H), out_dtype),
        compiler_params=pltpu.CompilerParams(vmem_limit_bytes=vmem_limit),
    )(patches, w_flat, bias, pos_tokens)


# ------------------ kernel B: per-batch assembly (hot path) ------------------

def _assemble_kernel(glob_ref, slab_ref, out_ref):
    """out[n] = base_slab  ;  out[n, :G, :] = glob[n] + pos_glob.

    glob_ref : (Nb, G, H)  global tokens for this batch block
    slab_ref : (T, H)      batch-invariant base slab (resident, single copy)
    out_ref  : (Nb, T, H)
    """
    nb, T, H = out_ref.shape
    G = glob_ref.shape[1]
    base = slab_ref[...]                                           # (T, H)
    # Dominant write: dense, sublane-aligned full-block store (leading-axis
    # broadcast, no concat / no misaligned patch-part store).
    out_ref[...] = jnp.broadcast_to(base[None, :, :], (nb, T, H))
    # Small overwrite of the first G rows with the per-batch global tokens
    # (base[:G] already holds pos_glob).
    out_ref[:, :G, :] = (glob_ref[...].astype(jnp.float32)
                         + base[:G, :][None, :, :].astype(jnp.float32)
                         ).astype(out_ref.dtype)


def recon_dec_embeddings(global_tokens, base_slab, *, block_n=None,
                         vmem_budget_bytes=None):
    """global_tokens: (N, G, H); base_slab: (T, H).  Returns (N, T, H)."""
    N, G, H = global_tokens.shape
    T, H2 = base_slab.shape
    assert H2 == H and T > G
    itemsize = jnp.dtype(global_tokens.dtype).itemsize

    cap = _vmem_capacity_bytes()
    # Budget and compiler limit agree; ~60% of physical VMEM by default
    # (≈38 MiB on v7x, ≈77 MiB on v5e/v6e).
    budget = int(cap * 0.6) if vmem_budget_bytes is None else int(vmem_budget_bytes)

    # Footprint: double-buffered output + global-token blocks per batch row,
    # plus ONE resident copy of the invariant slab (memory_space=VMEM input).
    per_row = 2 * (T + G) * H * itemsize
    inv_bytes = T * H * itemsize
    if block_n is None:
        block_n = (budget - inv_bytes) // per_row
    block_n = int(max(1, min(block_n, N)))
    if N > 1:
        # >= 2 grid steps so ("parallel",) shards the batch axis over both
        # TensorCores on v7x.
        block_n = min(block_n, pl.cdiv(N, 2))

    grid = (pl.cdiv(N, block_n),)          # partial last block handled by Pallas
    footprint = inv_bytes + block_n * per_row
    vmem_limit = int(min(cap - 4 * _MIB, max(footprint + 8 * _MIB, 32 * _MIB)))

    return pl.pallas_call(
        _assemble_kernel,
        out_shape=jax.ShapeDtypeStruct((N, T, H), global_tokens.dtype),
        grid=grid,
        in_specs=[
            pl.BlockSpec((block_n, G, H), lambda n: (n, 0, 0)),
            # Batch-invariant slab: fully VMEM-resident, single copy
            # (no per-step DMA, no double buffering).
            pl.BlockSpec(memory_space=pltpu.MemorySpace.VMEM),
        ],
        out_specs=pl.BlockSpec((block_n, T, H), lambda n: (n, 0, 0)),
        compiler_params=pltpu.CompilerParams(
            dimension_semantics=("parallel",),   # batch axis is independent
            vmem_limit_bytes=vmem_limit,
        ),
    )(global_tokens, base_slab)


# ------------------------------ glue / setup --------------------------------

def unfold_patches_nchw(image, patch_h, patch_w):
    """image: (1, C, H, W) -> (num_patches, C*ph*pw); K ordered (c, kh, kw),
    patches row-major over (h', w') — matches PyTorch Conv2d + flatten(2).T."""
    _, C, Hh, Ww = image.shape
    gh, gw = Hh // patch_h, Ww // patch_w
    x = image.reshape(C, gh, patch_h, gw, patch_w)
    x = jnp.transpose(x, (1, 3, 0, 2, 4))          # (gh, gw, C, ph, pw)
    return x.reshape(gh * gw, C * patch_h * patch_w)


def recon_dec_forward(global_tokens, image_init, conv_w, conv_b, pos_emb, patch_size):
    """Full ReconDecEmbeddings.forward (eval mode: dropout = identity)."""
    N, G, H = global_tokens.shape
    ph, pw = patch_size
    C = conv_w.shape[1]
    K = C * ph * pw
    assert conv_w.shape[0] == H
    T = pos_emb.shape[1]
    P = T - G

    patches = unfold_patches_nchw(image_init, ph, pw)      # (P, K)
    assert patches.shape == (P, K)
    w_flat = conv_w.reshape(H, K).T                        # (K, H), K ordered (c, kh, kw)
    bias = conv_b.reshape(1, H)
    pos_tokens = pos_emb.reshape(T, H)

    # Batch-invariant work: done once (kernel A), reused for every batch row.
    slab = compute_base_slab(patches, w_flat, bias, pos_tokens, global_tokens.dtype)
    # Per-batch assembly (kernel B, HBM-write bound).
    return recon_dec_embeddings(global_tokens, slab)


if __name__ == "__main__":
    # Small synthetic config (ViTConfig analogue).
    batch = 2
    num_channels = 4
    image_size = (16, 16)
    patch_size = (4, 4)
    hidden_size = 32
    num_global_tokens = 3

    gh = image_size[0] // patch_size[0]
    gw = image_size[1] // patch_size[1]
    num_patches = gh * gw                               # 16
    G = num_global_tokens + 1                           # 4
    T = num_patches + 1 + num_global_tokens             # 20
    K = num_channels * patch_size[0] * patch_size[1]    # 64

    key = jax.random.PRNGKey(0)
    k_img, k_w, k_b, k_pos, k_glob = jax.random.split(key, 5)

    image_init = jax.random.normal(
        k_img, (1, num_channels, image_size[0], image_size[1]), jnp.float32)
    conv_w = jax.random.normal(
        k_w, (hidden_size, num_channels, patch_size[0], patch_size[1]),
        jnp.float32) * 0.02
    conv_b = jax.random.normal(k_b, (hidden_size,), jnp.float32) * 0.02
    position_embeddings = jax.random.normal(
        k_pos, (1, T, hidden_size), jnp.float32)

    global_tokens = jax.random.normal(k_glob, (batch, G, hidden_size), jnp.float32)

    out = recon_dec_forward(global_tokens, image_init, conv_w, conv_b,
                            position_embeddings, patch_size)
    out = jax.block_until_ready(out)

    # Pure-JAX reference (dropout = identity in eval).  Reference matmul uses
    # highest precision; the in-kernel MXU matmul may use the default f32
    # passes, so tolerance allows bf16-pass rounding of the (small-magnitude)
    # patch embeddings while still catching any structural/index bug.
    patches_ref = unfold_patches_nchw(image_init, patch_size[0], patch_size[1])
    w_flat_ref = conv_w.reshape(hidden_size, K).T
    patch_emb_ref = jnp.dot(patches_ref, w_flat_ref,
                            precision=jax.lax.Precision.HIGHEST) + conv_b[None, :]
    emb_ref = jnp.concatenate(
        [global_tokens,
         jnp.broadcast_to(patch_emb_ref[None],
                          (batch, num_patches, hidden_size))],
        axis=1) + position_embeddings

    assert out.shape == (batch, T, hidden_size)
    assert out.dtype == global_tokens.dtype
    assert jnp.allclose(out, emb_ref, atol=2e-3, rtol=2e-3)

    print("KERNEL_OK")
</pallas_src>

<mosaic_0001>
module attributes {stable_mosaic.version = 11 : i64} {
  func.func @_base_slab_kernel(%arg0: memref<16x64xf32, #tpu.memory_space<vmem>>, %arg1: memref<64x32xf32, #tpu.memory_space<vmem>>, %arg2: memref<1x32xf32, #tpu.memory_space<vmem>>, %arg3: memref<20x32xf32, #tpu.memory_space<vmem>>, %arg4: memref<20x32xf32, #tpu.memory_space<vmem>>) attributes {dimension_semantics = [], scalar_prefetch = 0 : i64, scratch_operands = 0 : i64, tpu.core_type = #tpu.core_type<tc>} {
    %c0 = arith.constant 0 : index
    %c0_0 = arith.constant 0 : index
    %0 = vector.load %arg0[%c0, %c0_0] : memref<16x64xf32, #tpu.memory_space<vmem>>, vector<16x64xf32>
    %c0_1 = arith.constant 0 : index
    %c0_2 = arith.constant 0 : index
    %1 = vector.load %arg1[%c0_1, %c0_2] : memref<64x32xf32, #tpu.memory_space<vmem>>, vector<64x32xf32>
    %cst = arith.constant dense<0.000000e+00> : vector<16x32xf32>
    %2 = tpu.matmul %0, %1, %cst {dimension_numbers = #tpu.dot_dimension_numbers<[1], [0], [0], [1], [0, 0, 1, 1], [], []>} : vector<16x64xf32>, vector<64x32xf32>, vector<16x32xf32> -> vector<16x32xf32>
    %c0_3 = arith.constant 0 : index
    %c0_4 = arith.constant 0 : index
    %3 = vector.load %arg3[%c0_3, %c0_4] : memref<20x32xf32, #tpu.memory_space<vmem>>, vector<4x32xf32>
    %c0_5 = arith.constant 0 : index
    %c0_6 = arith.constant 0 : index
    %4 = vector.load %arg4[%c0_5, %c0_6] : memref<20x32xf32, #tpu.memory_space<vmem>>, vector<4x32xf32>
    tpu.vector_store %arg4[%c0_5, %c0_6], %3 {strides = array<i32>} : memref<20x32xf32, #tpu.memory_space<vmem>>, vector<4x32xf32>,
    %c0_7 = arith.constant 0 : index
    %c0_8 = arith.constant 0 : index
    %5 = vector.load %arg2[%c0_7, %c0_8] : memref<1x32xf32, #tpu.memory_space<vmem>>, vector<1x32xf32>
    %6 = vector.broadcast %5 : vector<1x32xf32> to vector<16x32xf32>
    %7 = arith.addf %2, %6 : vector<16x32xf32>
    %c4 = arith.constant 4 : index
    %c0_9 = arith.constant 0 : index
    %8 = vector.load %arg3[%c4, %c0_9] : memref<20x32xf32, #tpu.memory_space<vmem>>, vector<16x32xf32>
    %9 = arith.addf %7, %8 : vector<16x32xf32>
    %c4_10 = arith.constant 4 : index
    %c0_11 = arith.constant 0 : index
    %10 = vector.load %arg4[%c4_10, %c0_11] : memref<20x32xf32, #tpu.memory_space<vmem>>, vector<16x32xf32>
    tpu.vector_store %arg4[%c4_10, %c0_11], %9 {strides = array<i32>} : memref<20x32xf32, #tpu.memory_space<vmem>>, vector<16x32xf32>,
    return
  }
}

</mosaic_0001>

<llo_original>
// kernel: tpu_custom_call.1
$region0: #{tpu_custom_call.1}
  #allocation0 [shape = 'u32[]', space=smem, size = 0x4, offset = 0x4, fixed_abs, tag = 'smem constant byte address 0x4 - core index']
  #allocation1 [shape = 'u32[144,128]{1,0:T(1,128)}', space=vmem, size = 0x12000, scoped, tag = 'internal scratch']
  %s0 = inlined_call_operand.vmem [shape: f32[16,64], index: 0, kind: input, shape index: {}]
  %s1 = inlined_call_operand.vmem [shape: f32[64,32], index: 1, kind: input, shape index: {}]
  %s2 = inlined_call_operand.vmem [shape: f32[1,32], index: 2, kind: input, shape index: {}]
  %s3 = inlined_call_operand.vmem [shape: f32[20,32], index: 3, kind: input, shape index: {}]
  %s4 = inlined_call_operand.hbm [shape: f32[20,32], index: 4, kind: output, shape index: {}]
  %s5 = sld [smem:[#allocation0]]
  $region26: #{tpu_custom_call.1} parent=0
    _
  %s7 = ssub.s32 1, %s5
  %s8 = scalar_select 0, %s7, %s5
  $region1: #{tpu_custom_call.1} parent=0
    #allocation2 [shape = 'u8[12288]{0}', space=vmem, size = 0x3000, scoped, tag = 'output window, operand 0, single buffered']
    #allocation3 [shape = 's32[1]{0}', space=sflag, size = 0x4, scoped, tag = 'scoped memory for tpu_custom_call.1']
    %9 = vsyncpa [#allocation3], 0
    // Predicated region
    $region2: #{tpu_custom_call.1} parent=1 // pred_check
      _
    $region3: #{tpu_custom_call.1} parent=1 // pred_check_branch
      %11 = sbr.rel (0) target = $region5
    $region4: #{tpu_custom_call.1} parent=1 // pred_region
      _
    $region5: #{tpu_custom_call.1} parent=1 // pred_fallthru
      _
    // Predicated region
    $region6: #{tpu_custom_call.1} parent=1 // pred_check
      _
    $region7: #{tpu_custom_call.1} parent=1 // pred_check_branch
      %13 = sbr.rel (0) target = $region9
    $region8: #{tpu_custom_call.1} parent=1 // pred_region
      _
    $region9: #{tpu_custom_call.1} parent=1 // pred_fallthru
      _
    // Predicated region
    $region10: #{tpu_custom_call.1} parent=1 // pred_check
      _
    $region11: #{tpu_custom_call.1} parent=1 // pred_check_branch
      %15 = sbr.rel (0) target = $region13
    $region12: #{tpu_custom_call.1} parent=1 // pred_region
      _
    $region13: #{tpu_custom_call.1} parent=1 // pred_fallthru
      _
    // Predicated region
    $region14: #{tpu_custom_call.1} parent=1 // pred_check
      _
    $region15: #{tpu_custom_call.1} parent=1 // pred_check_branch
      %17 = sbr.rel (0) target = $region17
    $region16: #{tpu_custom_call.1} parent=1 // pred_region
      _
    $region17: #{tpu_custom_call.1} parent=1 // pred_fallthru
      _
    %v18 = vld [vmem:[%s0] sm:$0xff]
    %v19 = vld [vmem:[%s0 + $0x8] sm:$0xff]
    %v20 = vld [vmem:[%s1] sm:$0xff]
    %v21 = vld [vmem:[%s1 + $0x8] sm:$0xff]
    %v22 = vld [vmem:[%s1 + $0x10] sm:$0xff]
    %v23 = vld [vmem:[%s1 + $0x18] sm:$0xff]
    %v24 = vld [vmem:[%s1 + $0x20] sm:$0xff]
    %v25 = vld [vmem:[%s1 + $0x28] sm:$0xff]
    %v26 = vld [vmem:[%s1 + $0x30] sm:$0xff]
    %v27 = vld [vmem:[%s1 + $0x38] sm:$0xff]
    %v28 = vld [vmem:[%s3] sm:$0xf]
    %vm29 = vcmask 257024
    %30 = vst.msk [vmem:[#allocation2] sm:$0xf] %vm29, %v28
    %v31 = vld [vmem:[%s2] sm:$0x1]
    %v33 = vlaneseq
    %v34 = vshrl.u32 %v33, 7
    %v35 = vsub.s32 0, %v34
    %v36 = vrot.slane %v31, %v35
    %vm38 = vcmask 523264
    %v40 = vsel %vm38, %v18, 0
    %v43 = vsel %vm38, %v19, 0
    %45 = vmatprep.subr.mxu0 0.0
    %46 = vmatpush1.msra.mxu0 %v20
    %47 = vmatprep.subr.mxu0 0.0
    %48 = vmatpush1.msra.mxu0 %v21
    %49 = vmatprep.subr.mxu0 0.0
    %50 = vmatpush1.msra.mxu0 %v22
    %51 = vmatprep.subr.mxu0 0.0
    %52 = vmatpush1.msra.mxu0 %v23
    %53 = vmatprep.subr.mxu0 0.0
    %54 = vmatpush1.msra.mxu0 %v24
    %55 = vmatprep.subr.mxu0 0.0
    %56 = vmatpush1.msra.mxu0 %v25
    %57 = vmatprep.subr.mxu0 0.0
    %58 = vmatpush1.msra.mxu0 %v26
    %59 = vmatprep.subr.mxu0 0.0
    %60 = vmatpush1.msra.mxu0 %v27
    %61 = vmatprep.subr.mxu0 0.0
    %62 = vmatpush1.msra.mxu0 0.0
    %63 = vmatprep.subr.mxu0 0.0
    %64 = vmatpush1.msra.mxu0 0.0
    %65 = vmatprep.subr.mxu0 0.0
    %66 = vmatpush1.msra.mxu0 0.0
    %67 = vmatprep.subr.mxu0 0.0
    %68 = vmatpush1.msra.mxu0 0.0
    %69 = vmatprep.subr.mxu0 0.0
    %70 = vmatpush1.msra.mxu0 0.0
    %71 = vmatprep.subr.mxu0 0.0
    %72 = vmatpush1.msra.mxu0 0.0
    %73 = vmatprep.subr.mxu0 0.0
    %74 = vmatpush1.msra.mxu0 0.0
    %75 = vmatprep.subr.mxu0 0.0
    %76 = vmatpush1.msra.mxu0 0.0
    %77 = vmatprep.subr.mxu0 0.0
    %78 = vmatpush1.msra.mxu0 0.0
    %79 = vmatprep.subr.mxu0 0.0
    %80 = vmatpush1.msra.mxu0 0.0
    %81 = vmatprep.subr.mxu0 0.0
    %82 = vmatpush1.msra.mxu0 0.0
    %83 = vmatprep.subr.mxu0 0.0
    %84 = vmatpush1.msra.mxu0 0.0
    %85 = vmatprep.subr.mxu0 0.0
    %86 = vmatpush1.msra.mxu0 0.0
    %87 = vmatprep.subr.mxu0 0.0
    %88 = vmatpush1.msra.mxu0 0.0
    %89 = vmatprep.subr.mxu0 0.0
    %90 = vmatpush1.msra.mxu0 0.0
    %91 = vmatprep.subr.mxu0 0.0
    %92 = vmatpush1.msra.mxu0 0.0
    %93 = vmatprep.subr.mxu0 0.0
    %94 = vmatpush1.msra.mxu0 0.0
    %95 = vmatprep.subr.mxu0 0.0
    %96 = vmatpush1.msra.mxu0 0.0
    %97 = vmatprep.subr.mxu0 0.0
    %98 = vmatpush1.msra.mxu0 0.0
    %99 = vmatprep.subr.mxu0 0.0
    %100 = vmatpush1.msra.mxu0 0.0
    %101 = vmatprep.subr.mxu0 0.0
    %102 = vmatpush1.msra.mxu0 0.0
    %103 = vmatprep.subr.mxu0 0.0
    %104 = vmatpush1.msra.mxu0 0.0
    %105 = vmatprep.subr.mxu0 0.0
    %106 = vmatpush1.msra.mxu0 0.0
    %107 = vmatprep.subr.mxu0 0.0
    %108 = vmatpush1.msra.mxu0 0.0
    %109 = vmatprep.mubr.f32.mxu0 0.0
    %110 = vmatmul.mubr.f32.gmra.mrb[0].mxu0 %v40
    %v111 = vpop.f32.mrb[0].mxu0
    %v112 = vadd.f32 %v36, %v111
    %v113 = vpop.f32.mrb[0].mxu0
    %114 = vmatprep.mubr.f32.mxu0 0.0
    %115 = vmatmul.mubr.f32.gmra.mrb[0].mxu0 %v43
    %v116 = vpop.f32.mrb[0].mxu0
    %v117 = vadd.f32 %v36, %v116
    %v118 = vpop.f32.mrb[0].mxu0
    %119 = vdwg.mxu0
    %v120 = vld [vmem:[%s3 + $0x4] sm:$0xff]
    %v121 = vld [vmem:[%s3 + $0xc] sm:$0xff]
    %v122 = vadd.f32 %v112, %v120
    %v123 = vadd.f32 %v117, %v121
    %vm124 = vcmask 261120
    %125 = vst.msk [vmem:[#allocation2 + $0x4] sm:$0xff] %vm124, %v122
    %126 = vst.msk [vmem:[#allocation2 + $0xc] sm:$0xff] %vm124, %v123
    // Predicated region
    $region18: #{tpu_custom_call.1} parent=1 // pred_check
      _
    $region19: #{tpu_custom_call.1} parent=1 // pred_check_branch
      %128 = sbr.rel (0) target = $region21
    $region20: #{tpu_custom_call.1} parent=1 // pred_region
      %s130 = ssub.s32 384, 384
      %131 = vsyncadd [#allocation3], %s130
      %s132 = sshll.u32 [#allocation2], 4
      %s133 = int_to_ptr.vmem [resolvable:$true] %s132
      %138 = dma.vmem_to_hbm [thread:$0]  %s133, 384, %s4, [#allocation3], 128, 128, 8
    $region21: #{tpu_custom_call.1} parent=1 // pred_fallthru
      _
    // Predicated region
    $region22: #{tpu_custom_call.1} parent=1 // pred_check
      _
    $region23: #{tpu_custom_call.1} parent=1 // pred_check_branch
      %140 = sbr.rel (0) target = $region25
    $region24: #{tpu_custom_call.1} parent=1 // pred_region
      %141 = dma.done [#allocation3], 384
    $region25: #{tpu_custom_call.1} parent=1 // pred_fallthru
      _
    %142 = vsyncpa [#allocation3], 1

</llo_original>
